<compile_context>
chip_gen: v7x
topology: tpu7x:2x2x1
jax: 0.10.0
libtpu: 0.0.40
codegen_flags: <defaults>
</compile_context>

<pallas_src>
import jax
import jax.numpy as jnp
from jax import lax
from jax.experimental import pallas as pl
from jax.experimental.pallas import tpu as pltpu

_VMEM_LIMIT = 48 * 1024 * 1024  # explicit scoped-VMEM budget (below v7x 64 MiB physical)


def _round_up(x, m):
    return ((x + m - 1) // m) * m


# ----------------------------------------------------------------------------
# Encoder kernel: self.enc = Sequential(DenseInception(fc2=Identity), Linear(360,H))
# ----------------------------------------------------------------------------
def encode_kernel(p_ref, wp_ref, bp_ref, wv_ref, bv_ref, feat_ref):
    # TODO(synk): DenseInception internals are not given in the reference module;
    # a patchify -> linear -> ReLU stand-in producing the 360-d features is used.
    h = jnp.dot(p_ref[...], wp_ref[...], preferred_element_type=jnp.float32) + bp_ref[...]
    h = jnp.maximum(h, 0.0).astype(jnp.bfloat16)                         # (TM, FEATp)
    feat_ref[...] = (jnp.dot(h, wv_ref[...], preferred_element_type=jnp.float32)
                     + bv_ref[...])                                      # (TM, H) f32


def encode(eeg, enc_params, patch):
    B, T, C = eeg.shape
    s_enc = T // patch
    wp, bp, wv, bv = enc_params
    H = wv.shape[-1]
    Kp = patch * C
    Kp_pad = wp.shape[0]

    N = B * s_enc
    TM = 256 if N >= 256 else _round_up(N, 8)
    N_pad = _round_up(N, TM)

    patches = eeg[:, :s_enc * patch, :].reshape(N, Kp)                   # glue: im2col
    patches = jnp.pad(patches, ((0, N_pad - N), (0, Kp_pad - Kp))).astype(jnp.bfloat16)

    feat = pl.pallas_call(
        encode_kernel,
        grid=(N_pad // TM,),
        out_shape=jax.ShapeDtypeStruct((N_pad, H), jnp.float32),
        in_specs=[
            pl.BlockSpec((TM, Kp_pad), lambda i: (i, 0)),
            pl.BlockSpec(wp.shape, lambda i: (0, 0)),
            pl.BlockSpec(bp.shape, lambda i: (0, 0)),
            pl.BlockSpec(wv.shape, lambda i: (0, 0)),
            pl.BlockSpec(bv.shape, lambda i: (0, 0)),
        ],
        out_specs=pl.BlockSpec((TM, H), lambda i: (i, 0)),
        compiler_params=pltpu.CompilerParams(
            dimension_semantics=("parallel",),
            vmem_limit_bytes=_VMEM_LIMIT),
    )(patches, wp, bp, wv, bv)

    feat = feat[:N].reshape(B, s_enc, H)
    # mask = torch.sum(torch.abs(feature), dim=-1) != 0  (cheap XLA reduction, no
    # 1-lane-wide kernel store)
    mask = jnp.sum(jnp.abs(feat), axis=-1) != 0.0
    return feat, mask


# ----------------------------------------------------------------------------
# Decoder layer kernel: self.dec(input_ids, attention_mask, encoder_outputs, enc_mask)
# One post-LN transformer decoder layer, grid over batch (each program = one sample).
# ----------------------------------------------------------------------------
def decoder_kernel(x_ref, am_ref, enc_ref, em_ref,
                   sqkv_w, sqkv_b, so_w, so_b, ln1_g, ln1_b,
                   cq_w, cq_b, ckv_w, ckv_b, co_w, co_b, ln2_g, ln2_b,
                   f1_w, f1_b, f2_w, f2_b, ln3_g, ln3_b,
                   out_ref):
    # TODO(synk): DecoderModel / HF decoder config is external to this file; implemented
    # as one post-LN decoder layer (masked self-attn + cross-attn + GELU FFN).
    x = x_ref[0]                        # (Sd, H) f32
    am = am_ref[0]                      # (1, Sd) f32 {0,1}
    enc = enc_ref[0]                    # (Se, H) f32
    em = em_ref[0]                      # (1, Se) f32 {0,1}
    Sd, H = x.shape
    scale = 1.0 / (H ** 0.5)
    neg = -1e9

    def proj(v_bf16, w_ref, b_ref):     # (S, Hin)bf16 @ (Hin, F)bf16 -> (S, F)f32
        return jnp.dot(v_bf16, w_ref[...], preferred_element_type=jnp.float32) + b_ref[...]

    def layernorm(v, g_ref, b_ref):     # f32
        mu = jnp.mean(v, axis=-1, keepdims=True)
        var = jnp.mean(jnp.square(v - mu), axis=-1, keepdims=True)
        return (v - mu) * lax.rsqrt(var + 1e-12) * g_ref[...] + b_ref[...]

    def attention(q, k, v, bias):       # q,k,v bf16; scores/softmax f32
        s = jnp.einsum('qh,kh->qk', q, k, preferred_element_type=jnp.float32) * scale + bias
        m = jnp.max(s, axis=-1, keepdims=True)
        p = jnp.exp(s - m)
        denom = jnp.sum(p, axis=-1, keepdims=True)
        p = p * pl.reciprocal(denom, approx=True)
        return jnp.dot(p.astype(jnp.bfloat16), v, preferred_element_type=jnp.float32)

    # --- masked (causal + padding) self-attention, fused QKV projection ---
    rows = lax.broadcasted_iota(jnp.int32, (Sd, Sd), 0)
    cols = lax.broadcasted_iota(jnp.int32, (Sd, Sd), 1)
    causal = rows >= cols                                   # (Sd, Sd)
    pad = am > 0.5                                          # (1, Sd)
    self_bias = jnp.where(jnp.logical_and(causal, pad), 0.0, neg)

    x_bf = x.astype(jnp.bfloat16)
    qkv = proj(x_bf, sqkv_w, sqkv_b)                        # (Sd, 3H) f32
    q = qkv[:, :H].astype(jnp.bfloat16)
    k = qkv[:, H:2 * H].astype(jnp.bfloat16)
    v = qkv[:, 2 * H:].astype(jnp.bfloat16)
    sa = attention(q, k, v, self_bias)
    sa = proj(sa.astype(jnp.bfloat16), so_w, so_b)
    h1 = layernorm(x + sa, ln1_g, ln1_b)

    # --- cross-attention over encoder_outputs, fused KV projection ---
    cross_bias = jnp.where(em > 0.5, 0.0, neg)              # (1, Se)
    cq = proj(h1.astype(jnp.bfloat16), cq_w, cq_b).astype(jnp.bfloat16)
    ckv = proj(enc.astype(jnp.bfloat16), ckv_w, ckv_b)      # (Se, 2H) f32
    ck = ckv[:, :H].astype(jnp.bfloat16)
    cv = ckv[:, H:].astype(jnp.bfloat16)
    ca = attention(cq, ck, cv, cross_bias)
    ca = proj(ca.astype(jnp.bfloat16), co_w, co_b)
    h2 = layernorm(h1 + ca, ln2_g, ln2_b)

    # --- feed-forward (tanh-approx GELU; exact erf-GELU differs slightly) ---
    ff = proj(h2.astype(jnp.bfloat16), f1_w, f1_b)
    ff = jax.nn.gelu(ff, approximate=True)
    ff = proj(ff.astype(jnp.bfloat16), f2_w, f2_b)
    h3 = layernorm(h2 + ff, ln3_g, ln3_b)

    out_ref[0] = h3.astype(out_ref.dtype)


def decode_layer(x_emb, attention_mask, enc_feat, enc_mask, dec_params):
    B, Sd, H = x_emb.shape
    Se = enc_feat.shape[1]
    am = attention_mask.astype(jnp.float32).reshape(B, 1, Sd)
    em = enc_mask.astype(jnp.float32).reshape(B, 1, Se)
    flat = list(dec_params)

    data_specs = [
        pl.BlockSpec((1, Sd, H), lambda b: (b, 0, 0)),
        pl.BlockSpec((1, 1, Sd), lambda b: (b, 0, 0)),
        pl.BlockSpec((1, Se, H), lambda b: (b, 0, 0)),
        pl.BlockSpec((1, 1, Se), lambda b: (b, 0, 0)),
    ]
    # all decoder params are 2-D and stay resident across the batch grid
    w_specs = [pl.BlockSpec(p.shape, lambda b: (0, 0)) for p in flat]

    return pl.pallas_call(
        decoder_kernel,
        grid=(B,),
        out_shape=jax.ShapeDtypeStruct((B, Sd, H), jnp.bfloat16),
        in_specs=data_specs + w_specs,
        out_specs=pl.BlockSpec((1, Sd, H), lambda b: (b, 0, 0)),
        compiler_params=pltpu.CompilerParams(
            dimension_semantics=("parallel",),
            vmem_limit_bytes=_VMEM_LIMIT),
    )(x_emb, am, enc_feat, em, *flat)


# ----------------------------------------------------------------------------
# LM head kernel: tiled over (rows, vocab) so big vocabularies pipeline their DMA.
# ----------------------------------------------------------------------------
def lm_head_kernel(h_ref, w_ref, b_ref, o_ref):
    o_ref[...] = (jnp.dot(h_ref[...], w_ref[...], preferred_element_type=jnp.float32)
                  + b_ref[...])


def lm_head(h, lm_w, lm_b):
    R, H = h.shape
    V = lm_w.shape[1]
    TV = 256 if V % 256 == 0 else (128 if V % 128 == 0 else V)
    TR = 256 if R >= 256 else _round_up(R, 8)
    Rp = _round_up(R, TR)
    if Rp != R:
        h = jnp.pad(h, ((0, Rp - R), (0, 0)))

    logits = pl.pallas_call(
        lm_head_kernel,
        grid=(Rp // TR, V // TV),
        out_shape=jax.ShapeDtypeStruct((Rp, V), jnp.float32),
        in_specs=[
            pl.BlockSpec((TR, H), lambda i, j: (i, 0)),
            pl.BlockSpec((H, TV), lambda i, j: (0, j)),
            pl.BlockSpec((1, TV), lambda i, j: (0, j)),
        ],
        out_specs=pl.BlockSpec((TR, TV), lambda i, j: (i, j)),
        compiler_params=pltpu.CompilerParams(
            dimension_semantics=("parallel", "parallel"),
            vmem_limit_bytes=_VMEM_LIMIT),
    )(h.astype(jnp.bfloat16), lm_w, lm_b)
    return logits[:R]


# ----------------------------------------------------------------------------
# RRG_EEG.forward equivalent
# ----------------------------------------------------------------------------
def rrg_eeg_forward(params, input_ids, attention_mask, images):
    # RRG_EEG.encode: feature = visual_projection(eeg_enc(eeg)); mask = sum|feature| != 0
    enc_feat, enc_mask = encode(images, params['enc'], params['patch'])
    # token / position embedding (glue), then decoder layer + LM head kernels
    tok_emb, pos_emb = params['tok_emb'], params['pos_emb']
    x = tok_emb[input_ids] + pos_emb[None, :input_ids.shape[1], :]
    h3 = decode_layer(x, attention_mask, enc_feat, enc_mask, params['dec'])
    B, Sd, H = h3.shape
    logits = lm_head(h3.reshape(B * Sd, H), params['lm_w'], params['lm_b'])
    return logits.reshape(B, Sd, -1), enc_feat, enc_mask


def init_params(key, *, patch, C, feat_dim, H, ffn, vocab, max_pos):
    ks = iter(jax.random.split(key, 64))

    def w(shape, scale=0.02, dtype=jnp.bfloat16):
        return (scale * jax.random.normal(next(ks), shape, jnp.float32)).astype(dtype)

    zeros = lambda s: jnp.zeros(s, jnp.float32)
    ones = lambda s: jnp.ones(s, jnp.float32)

    Kp = patch * C
    Kp_pad, F_pad = _round_up(Kp, 128), _round_up(feat_dim, 128)
    # DenseInception stand-in + visual_projection Linear(360, H), zero-padded to
    # 128-aligned K/N so the MXU sees full tiles (zero pad keeps the math identical).
    wp = jnp.zeros((Kp_pad, F_pad), jnp.bfloat16).at[:Kp, :feat_dim].set(w((Kp, feat_dim)))
    bp = zeros((1, F_pad))
    wv = jnp.zeros((F_pad, H), jnp.bfloat16).at[:feat_dim, :].set(w((feat_dim, H)))
    bv = zeros((1, H))
    enc = (wp, bp, wv, bv)

    dec = (
        # fused self-attention QKV + output projection + LN1
        w((H, 3 * H)), zeros((1, 3 * H)), w((H, H)), zeros((1, H)), ones((1, H)), zeros((1, H)),
        # cross-attention Q, fused KV, output projection + LN2
        w((H, H)), zeros((1, H)), w((H, 2 * H)), zeros((1, 2 * H)),
        w((H, H)), zeros((1, H)), ones((1, H)), zeros((1, H)),
        # FFN + LN3
        w((H, ffn)), zeros((1, ffn)), w((ffn, H)), zeros((1, H)), ones((1, H)), zeros((1, H)),
    )
    return {'enc': enc, 'dec': dec,
            'lm_w': w((H, vocab)), 'lm_b': zeros((1, vocab)),
            'tok_emb': w((vocab, H), dtype=jnp.float32),
            'pos_emb': w((max_pos, H), dtype=jnp.float32),
            'patch': patch}


if __name__ == "__main__":
    key = jax.random.PRNGKey(0)
    B, T, C = 2, 32, 19        # small EEG stand-in for data_shape=(2400, 19)
    PATCH = 8                  # -> S_enc = 4 encoder tokens
    FEAT = 360                 # DenseInception output dim / visual_projection input dim
    H = 128                    # decoder hidden_size (128-aligned for the MXU)
    FFN = 4 * H
    VOCAB = 512
    S_DEC = 8

    k_p, k_eeg, k_ids = jax.random.split(key, 3)
    params = init_params(k_p, patch=PATCH, C=C, feat_dim=FEAT, H=H,
                         ffn=FFN, vocab=VOCAB, max_pos=S_DEC)

    images = jax.random.normal(k_eeg, (B, T, C), dtype=jnp.float32)
    input_ids = jax.random.randint(k_ids, (B, S_DEC), 0, VOCAB)
    attention_mask = jnp.ones((B, S_DEC), jnp.int32).at[1, -2:].set(0)

    logits, enc_feat, enc_mask = rrg_eeg_forward(params, input_ids, attention_mask, images)
    jax.block_until_ready((logits, enc_feat, enc_mask))

    assert logits.shape == (B, S_DEC, VOCAB)
    assert enc_feat.shape == (B, T // PATCH, H)
    assert enc_mask.shape == (B, T // PATCH) and enc_mask.dtype == jnp.bool_
    print("KERNEL_OK")
</pallas_src>

<mosaic_0001>
module attributes {stable_mosaic.version = 11 : i64} {
  func.func @encode_kernel(%arg0: i32, %arg1: memref<8x256xbf16, #tpu.memory_space<vmem>>, %arg2: memref<256x384xbf16, #tpu.memory_space<vmem>>, %arg3: memref<1x384xf32, #tpu.memory_space<vmem>>, %arg4: memref<384x128xbf16, #tpu.memory_space<vmem>>, %arg5: memref<1x128xf32, #tpu.memory_space<vmem>>, %arg6: memref<8x128xf32, #tpu.memory_space<vmem>>) attributes {dimension_semantics = [#tpu.dimension_semantics<parallel>], iteration_bounds = array<i64: 1>, scalar_prefetch = 0 : i64, scratch_operands = 0 : i64, tpu.core_type = #tpu.core_type<tc>, window_params = [{transform_indices = @transform_0, window_bounds = array<i64: 8, 256>}, {pipeline_mode = #tpu.pipeline_mode<synchronous>, transform_indices = @transform_1, window_bounds = array<i64: 256, 384>}, {pipeline_mode = #tpu.pipeline_mode<synchronous>, transform_indices = @transform_2, window_bounds = array<i64: 1, 384>}, {pipeline_mode = #tpu.pipeline_mode<synchronous>, transform_indices = @transform_3, window_bounds = array<i64: 384, 128>}, {pipeline_mode = #tpu.pipeline_mode<synchronous>, transform_indices = @transform_4, window_bounds = array<i64: 1, 128>}, {transform_indices = @transform_5, window_bounds = array<i64: 8, 128>}]} {
    %c0 = arith.constant 0 : index
    %c0_0 = arith.constant 0 : index
    %0 = vector.load %arg1[%c0, %c0_0] : memref<8x256xbf16, #tpu.memory_space<vmem>>, vector<8x256xbf16>
    %c0_1 = arith.constant 0 : index
    %c0_2 = arith.constant 0 : index
    %1 = vector.load %arg2[%c0_1, %c0_2] : memref<256x384xbf16, #tpu.memory_space<vmem>>, vector<256x384xbf16>
    %cst = arith.constant dense<0.000000e+00> : vector<8x384xf32>
    %2 = tpu.matmul %0, %1, %cst {dimension_numbers = #tpu.dot_dimension_numbers<[1], [0], [0], [1], [0, 0, 1, 1], [], []>} : vector<8x256xbf16>, vector<256x384xbf16>, vector<8x384xf32> -> vector<8x384xf32>
    %c0_3 = arith.constant 0 : index
    %c0_4 = arith.constant 0 : index
    %3 = vector.load %arg3[%c0_3, %c0_4] : memref<1x384xf32, #tpu.memory_space<vmem>>, vector<1x384xf32>
    %4 = vector.broadcast %3 : vector<1x384xf32> to vector<8x384xf32>
    %5 = arith.addf %2, %4 : vector<8x384xf32>
    %cst_5 = arith.constant 0.000000e+00 : f32
    %6 = vector.broadcast %cst_5 : f32 to vector<8x384xf32>
    %7 = arith.maximumf %5, %6 : vector<8x384xf32>
    %8 = arith.truncf %7 : vector<8x384xf32> to vector<8x384xbf16>
    %c0_6 = arith.constant 0 : index
    %c0_7 = arith.constant 0 : index
    %9 = vector.load %arg4[%c0_6, %c0_7] : memref<384x128xbf16, #tpu.memory_space<vmem>>, vector<384x128xbf16>
    %cst_8 = arith.constant dense<0.000000e+00> : vector<8x128xf32>
    %10 = tpu.matmul %8, %9, %cst_8 {dimension_numbers = #tpu.dot_dimension_numbers<[1], [0], [0], [1], [0, 0, 1, 1], [], []>} : vector<8x384xbf16>, vector<384x128xbf16>, vector<8x128xf32> -> vector<8x128xf32>
    %c0_9 = arith.constant 0 : index
    %c0_10 = arith.constant 0 : index
    %11 = vector.load %arg5[%c0_9, %c0_10] : memref<1x128xf32, #tpu.memory_space<vmem>>, vector<1x128xf32>
    %12 = vector.broadcast %11 : vector<1x128xf32> to vector<8x128xf32>
    %13 = arith.addf %10, %12 : vector<8x128xf32>
    %c0_11 = arith.constant 0 : index
    %c0_12 = arith.constant 0 : index
    %14 = vector.load %arg6[%c0_11, %c0_12] : memref<8x128xf32, #tpu.memory_space<vmem>>, vector<8x128xf32>
    tpu.vector_store %arg6[%c0_11, %c0_12], %13 {strides = array<i32>} : memref<8x128xf32, #tpu.memory_space<vmem>>, vector<8x128xf32>,
    return
  }
  func.func @transform_0(%arg0: i32) -> (i32, i32) {
    %c0_i32 = arith.constant 0 : i32
    %c0_i32_0 = arith.constant 0 : i32
    return %arg0, %c0_i32 : i32, i32
  }
  func.func @transform_1(%arg0: i32) -> (i32, i32) {
    %c0_i32 = arith.constant 0 : i32
    %c0_i32_0 = arith.constant 0 : i32
    %c0_i32_1 = arith.constant 0 : i32
    return %c0_i32, %c0_i32_0 : i32, i32
  }
  func.func @transform_2(%arg0: i32) -> (i32, i32) {
    %c0_i32 = arith.constant 0 : i32
    %c0_i32_0 = arith.constant 0 : i32
    %c0_i32_1 = arith.constant 0 : i32
    return %c0_i32, %c0_i32_0 : i32, i32
  }
  func.func @transform_3(%arg0: i32) -> (i32, i32) {
    %c0_i32 = arith.constant 0 : i32
    %c0_i32_0 = arith.constant 0 : i32
    %c0_i32_1 = arith.constant 0 : i32
    return %c0_i32, %c0_i32_0 : i32, i32
  }
  func.func @transform_4(%arg0: i32) -> (i32, i32) {
    %c0_i32 = arith.constant 0 : i32
    %c0_i32_0 = arith.constant 0 : i32
    %c0_i32_1 = arith.constant 0 : i32
    return %c0_i32, %c0_i32_0 : i32, i32
  }
  func.func @transform_5(%arg0: i32) -> (i32, i32) {
    %c0_i32 = arith.constant 0 : i32
    %c0_i32_0 = arith.constant 0 : i32
    return %arg0, %c0_i32 : i32, i32
  }
}

</mosaic_0001>

<llo_original>
// kernel: tpu_custom_call.1
$region0: #{tpu_custom_call.1}
  #allocation0 [shape = 'u32[]', space=smem, size = 0x4, offset = 0x4, fixed_abs, tag = 'smem constant byte address 0x4 - core index']
  #allocation1 [shape = 'u32[144,128]{1,0:T(1,128)}', space=vmem, size = 0x12000, scoped, tag = 'internal scratch']
  %s0 = inlined_call_operand.hbm [shape: bf16[8,256], index: 0, kind: input, shape index: {}]
  %s1 = inlined_call_operand.hbm [shape: bf16[256,384], index: 1, kind: input, shape index: {}]
  %s2 = inlined_call_operand.vmem [shape: f32[1,384], index: 2, kind: input, shape index: {}]
  %s3 = inlined_call_operand.hbm [shape: bf16[384,128], index: 3, kind: input, shape index: {}]
  %s4 = inlined_call_operand.vmem [shape: f32[1,128], index: 4, kind: input, shape index: {}]
  %s5 = inlined_call_operand.hbm [shape: f32[8,128], index: 5, kind: output, shape index: {}]
  %s6 = sld [smem:[#allocation0]]
  $region42: #{tpu_custom_call.1} parent=0
    _
  %s8 = ssub.s32 1, %s6
  %s9 = scalar_select 0, %s8, %s6
  $region1: #{tpu_custom_call.1} parent=0
    #allocation2 [shape = 'u8[4096]{0}', space=vmem, size = 0x1000, scoped, tag = 'input window, operand 0, single buffered']
    #allocation3 [shape = 's32[1]{0}', space=sflag, size = 0x4, scoped, tag = 'scoped memory for tpu_custom_call.1']
    #allocation4 [shape = 's32[1]{0}', space=sflag, size = 0x4, scoped, tag = 'scoped memory for tpu_custom_call.1']
    #allocation5 [shape = 'u8[196608]{0}', space=vmem, size = 0x30000, scoped, tag = 'input window, operand 1, single buffered']
    #allocation6 [shape = 's32[1]{0}', space=sflag, size = 0x4, scoped, tag = 'scoped memory for tpu_custom_call.1']
    #allocation7 [shape = 'u8[98304]{0}', space=vmem, size = 0x18000, scoped, tag = 'input window, operand 3, single buffered']
    #allocation8 [shape = 'u8[4096]{0}', space=vmem, size = 0x1000, scoped, tag = 'output window, operand 0, single buffered']
    %10 = vsyncpa [#allocation3], 0
    %11 = vsyncpa [#allocation6], 0
    %12 = vsyncpa [#allocation4], 0
    // Predicated region
    $region2: #{tpu_custom_call.1} parent=1 // pred_check
      _
    $region3: #{tpu_custom_call.1} parent=1 // pred_check_branch
      %14 = sbr.rel (0) target = $region5
    $region4: #{tpu_custom_call.1} parent=1 // pred_region
      %s16 = ssub.s32 128, 128
      %17 = vsyncadd [#allocation3], %s16
      %s19 = sshll.u32 [#allocation2], 4
      %s20 = int_to_ptr.vmem [resolvable:$true] %s19
      %22 = dma.hbm_to_vmem [thread:$0]  %s0, 128, %s20, [#allocation3]
    $region5: #{tpu_custom_call.1} parent=1 // pred_fallthru
      _
    // Predicated region
    $region6: #{tpu_custom_call.1} parent=1 // pred_check
      _
    $region7: #{tpu_custom_call.1} parent=1 // pred_check_branch
      %24 = sbr.rel (0) target = $region9
    $region8: #{tpu_custom_call.1} parent=1 // pred_region
      %s26 = ssub.s32 6144, 6144
      %27 = vsyncadd [#allocation6], %s26
      %s28 = sshll.u32 [#allocation5], 4
      %s29 = int_to_ptr.vmem [resolvable:$true] %s28
      %34 = dma.hbm_to_vmem [thread:$0]  %s1, 6144, %s29, [#allocation6], 192, 192, 12
    $region9: #{tpu_custom_call.1} parent=1 // pred_fallthru
      _
    // Predicated region
    $region10: #{tpu_custom_call.1} parent=1 // pred_check
      _
    $region11: #{tpu_custom_call.1} parent=1 // pred_check_branch
      %36 = sbr.rel (0) target = $region13
    $region12: #{tpu_custom_call.1} parent=1 // pred_region
      _
    $region13: #{tpu_custom_call.1} parent=1 // pred_fallthru
      _
    // Predicated region
    $region14: #{tpu_custom_call.1} parent=1 // pred_check
      _
    $region15: #{tpu_custom_call.1} parent=1 // pred_check_branch
      %38 = sbr.rel (0) target = $region17
    $region16: #{tpu_custom_call.1} parent=1 // pred_region
      %s40 = ssub.s32 3072, 3072
      %41 = vsyncadd [#allocation6], %s40
      %s42 = sshll.u32 [#allocation7], 4
      %s43 = int_to_ptr.vmem [resolvable:$true] %s42
      %48 = dma.hbm_to_vmem [thread:$0]  %s3, 3072, %s43, [#allocation6], 64, 64, 4
    $region17: #{tpu_custom_call.1} parent=1 // pred_fallthru
      _
    // Predicated region
    $region18: #{tpu_custom_call.1} parent=1 // pred_check
      _
    $region19: #{tpu_custom_call.1} parent=1 // pred_check_branch
      %50 = sbr.rel (0) target = $region21
    $region20: #{tpu_custom_call.1} parent=1 // pred_region
      _
    $region21: #{tpu_custom_call.1} parent=1 // pred_fallthru
      _
    // Predicated region
    $region22: #{tpu_custom_call.1} parent=1 // pred_check
      _
    $region23: #{tpu_custom_call.1} parent=1 // pred_check_branch
      %52 = sbr.rel (0) target = $region25
    $region24: #{tpu_custom_call.1} parent=1 // pred_region
      %53 = dma.done [#allocation3], 128
    $region25: #{tpu_custom_call.1} parent=1 // pred_fallthru
      _
    // Predicated region
    $region26: #{tpu_custom_call.1} parent=1 // pred_check
      _
    $region27: #{tpu_custom_call.1} parent=1 // pred_check_branch
      %55 = sbr.rel (0) target = $region29
    $region28: #{tpu_custom_call.1} parent=1 // pred_region
      %56 = dma.done [#allocation6], 6144
    $region29: #{tpu_custom_call.1} parent=1 // pred_fallthru
      _
    // Predicated region
    $region30: #{tpu_custom_call.1} parent=1 // pred_check
      _
    $region31: #{tpu_custom_call.1} parent=1 // pred_check_branch
      %58 = sbr.rel (0) target = $region33
    $region32: #{tpu_custom_call.1} parent=1 // pred_region
      %59 = dma.done [#allocation6], 3072
    $region33: #{tpu_custom_call.1} parent=1 // pred_fallthru
      _
    %v61 = vld [vmem:[#allocation2] sm:$0xff]
    %v62 = vld [vmem:[#allocation5] sm:$0xff]
    %v63 = vld [vmem:[#allocation5 + $0x8] sm:$0xf]
    %v64 = vld [vmem:[#allocation5 + $0xc] sm:$0xff]
    %v65 = vld [vmem:[#allocation5 + $0x14] sm:$0xf]
    %v66 = vld [vmem:[#allocation5 + $0x18] sm:$0xff]
    %v67 = vld [vmem:[#allocation5 + $0x20] sm:$0xf]
    %v68 = vld [vmem:[#allocation5 + $0x24] sm:$0xff]
    %v69 = vld [vmem:[#allocation5 + $0x2c] sm:$0xf]
    %v70 = vld [vmem:[#allocation5 + $0x30] sm:$0xff]
    %v71 = vld [vmem:[#allocation5 + $0x38] sm:$0xf]
    %v72 = vld [vmem:[#allocation5 + $0x3c] sm:$0xff]
    %v73 = vld [vmem:[#allocation5 + $0x44] sm:$0xf]
    %v74 = vld [vmem:[#allocation5 + $0x48] sm:$0xff]
    %v75 = vld [vmem:[#allocation5 + $0x50] sm:$0xf]
    %v76 = vld [vmem:[#allocation5 + $0x54] sm:$0xff]
    %v77 = vld [vmem:[#allocation5 + $0x5c] sm:$0xf]
    %v78 = vld [vmem:[#allocation5 + $0x60] sm:$0xff]
    %v79 = vld [vmem:[#allocation5 + $0x68] sm:$0xf]
    %v80 = vld [vmem:[#allocation5 + $0x6c] sm:$0xff]
    %v81 = vld [vmem:[#allocation5 + $0x74] sm:$0xf]
    %v82 = vld [vmem:[#allocation5 + $0x78] sm:$0xff]
    %v83 = vld [vmem:[#allocation5 + $0x80] sm:$0xf]
    %v84 = vld [vmem:[#allocation5 + $0x84] sm:$0xff]
    %v85 = vld [vmem:[#allocation5 + $0x8c] sm:$0xf]
    %v86 = vld [vmem:[#allocation5 + $0x90] sm:$0xff]
    %v87 = vld [vmem:[#allocation5 + $0x98] sm:$0xf]
    %v88 = vld [vmem:[#allocation5 + $0x9c] sm:$0xff]
    %v89 = vld [vmem:[#allocation5 + $0xa4] sm:$0xf]
    %v90 = vld [vmem:[#allocation5 + $0xa8] sm:$0xff]
    %v91 = vld [vmem:[#allocation5 + $0xb0] sm:$0xf]
    %v92 = vld [vmem:[#allocation5 + $0xb4] sm:$0xff]
    %v93 = vld [vmem:[#allocation5 + $0xbc] sm:$0xf]
    %v94 = vld [vmem:[#allocation5 + $0xc0] sm:$0xff]
    %v95 = vld [vmem:[#allocation5 + $0xc8] sm:$0xf]
    %v96 = vld [vmem:[#allocation5 + $0xcc] sm:$0xff]
    %v97 = vld [vmem:[#allocation5 + $0xd4] sm:$0xf]
    %v98 = vld [vmem:[#allocation5 + $0xd8] sm:$0xff]
    %v99 = vld [vmem:[#allocation5 + $0xe0] sm:$0xf]
    %v100 = vld [vmem:[#allocation5 + $0xe4] sm:$0xff]
    %v101 = vld [vmem:[#allocation5 + $0xec] sm:$0xf]
    %v102 = vld [vmem:[#allocation5 + $0xf0] sm:$0xff]
    %v103 = vld [vmem:[#allocation5 + $0xf8] sm:$0xf]
    %v104 = vld [vmem:[#allocation5 + $0xfc] sm:$0xff]
    %v105 = vld [vmem:[#allocation5 + $0x104] sm:$0xf]
    %v106 = vld [vmem:[#allocation5 + $0x108] sm:$0xff]
    %v107 = vld [vmem:[#allocation5 + $0x110] sm:$0xf]
    %v108 = vld [vmem:[#allocation5 + $0x114] sm:$0xff]
    %v109 = vld [vmem:[#allocation5 + $0x11c] sm:$0xf]
    %v110 = vld [vmem:[#allocation5 + $0x120] sm:$0xff]
    %v111 = vld [vmem:[#allocation5 + $0x128] sm:$0xf]
    %v112 = vld [vmem:[#allocation5 + $0x12c] sm:$0xff]
    %v113 = vld [vmem:[#allocation5 + $0x134] sm:$0xf]
    %v114 = vld [vmem:[#allocation5 + $0x138] sm:$0xff]
    %v115 = vld [vmem:[#allocation5 + $0x140] sm:$0xf]
    %v116 = vld [vmem:[#allocation5 + $0x144] sm:$0xff]
    %v117 = vld [vmem:[#allocation5 + $0x14c] sm:$0xf]
    %v118 = vld [vmem:[#allocation5 + $0x150] sm:$0xff]
    %v119 = vld [vmem:[#allocation5 + $0x158] sm:$0xf]
    %v120 = vld [vmem:[#allocation5 + $0x15c] sm:$0xff]
    %v121 = vld [vmem:[#allocation5 + $0x164] sm:$0xf]
    %v122 = vld [vmem:[#allocation5 + $0x168] sm:$0xff]
    %v123 = vld [vmem:[#allocation5 + $0x170] sm:$0xf]
    %v124 = vld [vmem:[#allocation5 + $0x174] sm:$0xff]
    %v125 = vld [vmem:[#allocation5 + $0x17c] sm:$0xf]
    %v126 = vld [vmem:[%s2] sm:$0x7]
    %v128 = vlaneseq
    %v129 = vshrl.u32 %v128, 7
    %v130 = vsub.s32 0, %v129
    %v131 = vrot.slane %v126, %v130
    %v132 = vlaneseq
    %v133 = vshrl.u32 %v132, 7
    %v134 = vsub.s32 1, %v133
    %v135 = vrot.slane %v126, %v134
    %v136 = vlaneseq
    %v137 = vshrl.u32 %v136, 7
    %v138 = vsub.s32 2, %v137
    %v139 = vrot.slane %v126, %v138
    %v144 = vunpack.c.l.b16 %v61
    %v145 = vunpack.c.h.b16 %v61
    %v146 = vpack.c.b16 %v144, %v144
    %v147 = vpack.c.b16 %v145, %v145
    %v214 = vunpack.c.l.b16 %v62
    %v215 = vunpack.c.h.b16 %v62
    %v216 = vunpack.c.l.b16 %v63
    %v217 = vunpack.c.l.b16 %v64
    %v218 = vunpack.c.h.b16 %v64
    %v219 = vunpack.c.l.b16 %v65
    %v220 = vunpack.c.l.b16 %v66
    %v221 = vunpack.c.h.b16 %v66
    %v222 = vunpack.c.l.b16 %v67
    %v223 = vunpack.c.l.b16 %v68
    %v224 = vunpack.c.h.b16 %v68
    %v225 = vunpack.c.l.b16 %v69
    %v226 = vunpack.c.l.b16 %v70
    %v227 = vunpack.c.h.b16 %v70
    %v228 = vunpack.c.l.b16 %v71
    %v229 = vunpack.c.l.b16 %v72
    %v230 = vunpack.c.h.b16 %v72
    %v231 = vunpack.c.l.b16 %v73
    %v232 = vunpack.c.l.b16 %v74
    %v233 = vunpack.c.h.b16 %v74
    %v234 = vunpack.c.l.b16 %v75
    %v235 = vunpack.c.l.b16 %v76
    %v236 = vunpack.c.h.b16 %v76
    %v237 = vunpack.c.l.b16 %v77
    %v238 = vunpack.c.l.b16 %v78
    %v239 = vunpack.c.h.b16 %v78
    %v240 = vunpack.c.l.b16 %v79
    %v241 = vunpack.c.l.b16 %v80
    %v242 = vunpack.c.h.b16 %v80
    %v243 = vunpack.c.l.b16 %v81
    %v244 = vunpack.c.l.b16 %v82
    %v245 = vunpack.c.h.b16 %v82
    %v246 = vunpack.c.l.b16 %v83
    %v247 = vunpack.c.l.b16 %v84
    %v248 = vunpack.c.h.b16 %v84
    %v249 = vunpack.c.l.b16 %v85
    %v250 = vunpack.c.l.b16 %v86
    %v251 = vunpack.c.h.b16 %v86
    %v252 = vunpack.c.l.b16 %v87
    %v253 = vunpack.c.l.b16 %v88
    %v254 = vunpack.c.h.b16 %v88
    %v255 = vunpack.c.l.b16 %v89
    %v256 = vunpack.c.l.b16 %v90
    %v257 = vunpack.c.h.b16 %v90
    %v258 = vunpack.c.l.b16 %v91
    %v259 = vunpack.c.l.b16 %v92
    %v260 = vunpack.c.h.b16 %v92
    %v261 = vunpack.c.l.b16 %v93
    %v262 = vunpack.c.l.b16 %v94
    %v263 = vunpack.c.h.b16 %v94
    %v264 = vunpack.c.l.b16 %v95
    %v265 = vunpack.c.l.b16 %v96
    %v266 = vunpack.c.h.b16 %v96
    %v267 = vunpack.c.l.b16 %v97
    %v268 = vunpack.c.l.b16 %v98
    %v269 = vunpack.c.h.b16 %v98
    %v270 = vunpack.c.l.b16 %v99
    %v271 = vunpack.c.l.b16 %v100
    %v272 = vunpack.c.h.b16 %v100
    %v273 = vunpack.c.l.b16 %v101
    %v274 = vunpack.c.l.b16 %v102
    %v275 = vunpack.c.h.b16 %v102
    %v276 = vunpack.c.l.b16 %v103
    %v277 = vunpack.c.l.b16 %v104
    %v278 = vunpack.c.h.b16 %v104
    %v279 = vunpack.c.l.b16 %v105
    %v280 = vunpack.c.l.b16 %v106
    %v281 = vunpack.c.h.b16 %v106
    %v282 = vunpack.c.l.b16 %v107
    %v283 = vunpack.c.l.b16 %v108
    %v284 = vunpack.c.h.b16 %v108
    %v285 = vunpack.c.l.b16 %v109
    %v286 = vunpack.c.l.b16 %v110
    %v287 = vunpack.c.h.b16 %v110
    %v288 = vunpack.c.l.b16 %v111
    %v289 = vunpack.c.l.b16 %v112
    %v290 = vunpack.c.h.b16 %v112
    %v291 = vunpack.c.l.b16 %v113
    %v292 = vunpack.c.l.b16 %v114
    %v293 = vunpack.c.h.b16 %v114
    %v294 = vunpack.c.l.b16 %v115
    %v295 = vunpack.c.l.b16 %v116
    %v296 = vunpack.c.h.b16 %v116
    %v297 = vunpack.c.l.b16 %v117
    %v298 = vunpack.c.l.b16 %v118
    %v299 = vunpack.c.h.b16 %v118
    %v300 = vunpack.c.l.b16 %v119
    %v301 = vunpack.c.l.b16 %v120
    %v302 = vunpack.c.h.b16 %v120
    %v303 = vunpack.c.l.b16 %v121
    %v304 = vunpack.c.l.b16 %v122
    %v305 = vunpack.c.h.b16 %v122
    %v306 = vunpack.c.l.b16 %v123
    %v307 = vunpack.c.l.b16 %v124
    %v308 = vunpack.c.h.b16 %v124
    %v309 = vunpack.c.l.b16 %v125
    %v310 = vpack.c.b16 %v217, %v214
    %v311 = vpack.c.b16 %v218, %v215
    %v312 = vpack.c.b16 %v219, %v216
    %v313 = vpack.c.b16 %v223, %v220
    %v314 = vpack.c.b16 %v224, %v221
    %v315 = vpack.c.b16 %v225, %v222
    %v316 = vpack.c.b16 %v229, %v226
    %v317 = vpack.c.b16 %v230, %v227
    %v318 = vpack.c.b16 %v231, %v228
    %v319 = vpack.c.b16 %v235, %v232
    %v320 = vpack.c.b16 %v236, %v233
    %v321 = vpack.c.b16 %v237, %v234
    %v322 = vpack.c.b16 %v241, %v238
    %v323 = vpack.c.b16 %v242, %v239
    %v324 = vpack.c.b16 %v243, %v240
    %v325 = vpack.c.b16 %v247, %v244
    %v326 = vpack.c.b16 %v248, %v245
    %v327 = vpack.c.b16 %v249, %v246
    %v328 = vpack.c.b16 %v253, %v250
    %v329 = vpack.c.b16 %v254, %v251
    %v330 = vpack.c.b16 %v255, %v252
    %v331 = vpack.c.b16 %v259, %v256
    %v332 = vpack.c.b16 %v260, %v257
    %v333 = vpack.c.b16 %v261, %v258
    %v334 = vpack.c.b16 %v265, %v262
    %v335 = vpack.c.b16 %v266, %v263
    %v336 = vpack.c.b16 %v267, %v264
    %v337 = vpack.c.b16 %v271, %v268
    %v338 = vpack.c.b16 %v272, %v269
    %v339 = vpack.c.b16 %v273, %v270
    %v340 = vpack.c.b16 %v277, %v274
    %v341 = vpack.c.b16 %v278, %v275
    %v342 = vpack.c.b16 %v279, %v276
    %v343 = vpack.c.b16 %v283, %v280
    %v344 = vpack.c.b16 %v284, %v281
    %v345 = vpack.c.b16 %v285, %v282
    %v346 = vpack.c.b16 %v289, %v286
    %v347 = vpack.c.b16 %v290, %v287
    %v348 = vpack.c.b16 %v291, %v288
    %v349 = vpack.c.b16 %v295, %v292
    %v350 = vpack.c.b16 %v296, %v293
    %v351 = vpack.c.b16 %v297, %v294
    %v352 = vpack.c.b16 %v301, %v298
    %v353 = vpack.c.b16 %v302, %v299
    %v354 = vpack.c.b16 %v303, %v300
    %v355 = vpack.c.b16 %v307, %v304
    %v356 = vpack.c.b16 %v308, %v305
    %v357 = vpack.c.b16 %v309, %v306
    %406 = vmatprep.subr.bf16.mxu0 %v311
    %407 = vmatpush1.bf16.msra.mxu0 %v310
    %408 = vmatprep.subr.bf16.mxu0 %v314
    %409 = vmatpush1.bf16.msra.mxu0 %v313
    %410 = vmatprep.subr.bf16.mxu0 %v317
    %411 = vmatpush1.bf16.msra.mxu0 %v316
    %412 = vmatprep.subr.bf16.mxu0 %v320
    %413 = vmatpush1.bf16.msra.mxu0 %v319
    %414 = vmatprep.subr.bf16.mxu0 %v323
    %415 = vmatpush1.bf16.msra.mxu0 %v322
    %416 = vmatprep.subr.bf16.mxu0 %v326
    %417 = vmatpush1.bf16.msra.mxu0 %v325
    %418 = vmatprep.subr.bf16.mxu0 %v329
    %419 = vmatpush1.bf16.msra.mxu0 %v328
    %420 = vmatprep.subr.bf16.mxu0 %v332
    %421 = vmatpush1.bf16.msra.mxu0 %v331
    %422 = vmatprep.subr.bf16.mxu0 %v335
    %423 = vmatpush1.bf16.msra.mxu0 %v334
    %424 = vmatprep.subr.bf16.mxu0 %v338
    %425 = vmatpush1.bf16.msra.mxu0 %v337
    %426 = vmatprep.subr.bf16.mxu0 %v341
    %427 = vmatpush1.bf16.msra.mxu0 %v340
    %428 = vmatprep.subr.bf16.mxu0 %v344
    %429 = vmatpush1.bf16.msra.mxu0 %v343
    %430 = vmatprep.subr.bf16.mxu0 %v347
    %431 = vmatpush1.bf16.msra.mxu0 %v346
    %432 = vmatprep.subr.bf16.mxu0 %v350
    %433 = vmatpush1.bf16.msra.mxu0 %v349
    %434 = vmatprep.subr.bf16.mxu0 %v353
    %435 = vmatpush1.bf16.msra.mxu0 %v352
    %436 = vmatprep.subr.bf16.mxu0 %v356
    %437 = vmatpush1.bf16.msra.mxu0 %v355
    %438 = vmatprep.mubr.bf16.mxu0 %v147
    %439 = vmatmul.mubr.bf16.gmra.mrb[0].mxu0 %v146
    %v440 = vpop.f32.mrb[0].mxu0
    %v441 = vadd.f32 %v131, %v440
    %v442 = vpop.f32.mrb[0].mxu0
    %v443 = vadd.f32 %v135, %v442
    %v444 = vpop.f32.mrb[0].mxu0
    %v445 = vpop.f32.mrb[0].mxu0
    %446 = vdwg.mxu0
    %447 = vmatprep.subr.bf16.mxu0 0
    %448 = vmatpush1.bf16.msra.mxu0 %v312
    %449 = vmatprep.subr.bf16.mxu0 0
    %450 = vmatpush1.bf16.msra.mxu0 %v315
    %451 = vmatprep.subr.bf16.mxu0 0
    %452 = vmatpush1.bf16.msra.mxu0 %v318
    %453 = vmatprep.subr.bf16.mxu0 0
    %454 = vmatpush1.bf16.msra.mxu0 %v321
    %455 = vmatprep.subr.bf16.mxu0 0
    %456 = vmatpush1.bf16.msra.mxu0 %v324
    %457 = vmatprep.subr.bf16.mxu0 0
    %458 = vmatpush1.bf16.msra.mxu0 %v327
    %459 = vmatprep.subr.bf16.mxu0 0
    %460 = vmatpush1.bf16.msra.mxu0 %v330
    %461 = vmatprep.subr.bf16.mxu0 0
    %462 = vmatpush1.bf16.msra.mxu0 %v333
    %463 = vmatprep.subr.bf16.mxu0 0
    %464 = vmatpush1.bf16.msra.mxu0 %v336
    %465 = vmatprep.subr.bf16.mxu0 0
    %466 = vmatpush1.bf16.msra.mxu0 %v339
    %467 = vmatprep.subr.bf16.mxu0 0
    %468 = vmatpush1.bf16.msra.mxu0 %v342
    %469 = vmatprep.subr.bf16.mxu0 0
    %470 = vmatpush1.bf16.msra.mxu0 %v345
    %471 = vmatprep.subr.bf16.mxu0 0
    %472 = vmatpush1.bf16.msra.mxu0 %v348
    %473 = vmatprep.subr.bf16.mxu0 0
    %474 = vmatpush1.bf16.msra.mxu0 %v351
    %475 = vmatprep.subr.bf16.mxu0 0
    %476 = vmatpush1.bf16.msra.mxu0 %v354
    %477 = vmatprep.subr.bf16.mxu0 0
    %478 = vmatpush1.bf16.msra.mxu0 %v357
    %479 = vmatprep.mubr.bf16.mxu0 %v147
    %480 = vmatmul.mubr.bf16.gmra.mrb[0].mxu0 %v146
    %v481 = vpop.f32.mrb[0].mxu0
    %v482 = vadd.f32 %v139, %v481
    %v483 = vpop.f32.mrb[0].mxu0
    %v484 = vpop.f32.mrb[0].mxu0
    %v485 = vpop.f32.mrb[0].mxu0
    %486 = vdwg.mxu0
    %v487 = vmax.f32 %v441, 0.0
    %v488 = vmax.f32 %v443, 0.0
    %v489 = vmax.f32 %v482, 0.0
    %v490 = vpack.c.bf16 %v487, %v487
    %v491 = vpack.c.bf16 %v488, %v488
    %v492 = vpack.c.bf16 %v489, %v489
    %v493 = vld [vmem:[#allocation7] sm:$0xf]
    %v494 = vld [vmem:[#allocation7 + $0x4] sm:$0xf]
    %v495 = vld [vmem:[#allocation7 + $0x8] sm:$0xf]
    %v496 = vld [vmem:[#allocation7 + $0xc] sm:$0xf]
    %v497 = vld [vmem:[#allocation7 + $0x10] sm:$0xf]
    %v498 = vld [vmem:[#allocation7 + $0x14] sm:$0xf]
    %v499 = vld [vmem:[#allocation7 + $0x18] sm:$0xf]
    %v500 = vld [vmem:[#allocation7 + $0x1c] sm:$0xf]
    %v501 = vld [vmem:[#allocation7 + $0x20] sm:$0xf]
    %v502 = vld [vmem:[#allocation7 + $0x24] sm:$0xf]
    %v503 = vld [vmem:[#allocation7 + $0x28] sm:$0xf]
    %v504 = vld [vmem:[#allocation7 + $0x2c] sm:$0xf]
    %v505 = vld [vmem:[#allocation7 + $0x30] sm:$0xf]
    %v506 = vld [vmem:[#allocation7 + $0x34] sm:$0xf]
    %v507 = vld [vmem:[#allocation7 + $0x38] sm:$0xf]
    %v508 = vld [vmem:[#allocation7 + $0x3c] sm:$0xf]
    %v509 = vld [vmem:[#allocation7 + $0x40] sm:$0xf]
    %v510 = vld [vmem:[#allocation7 + $0x44] sm:$0xf]
    %v511 = vld [vmem:[#allocation7 + $0x48] sm:$0xf]
    %v512 = vld [vmem:[#allocation7 + $0x4c] sm:$0xf]
    %v513 = vld [vmem:[#allocation7 + $0x50] sm:$0xf]
    %v514 = vld [vmem:[#allocation7 + $0x54] sm:$0xf]
    %v515 = vld [vmem:[#allocation7 + $0x58] sm:$0xf]
    %v516 = vld [vmem:[#allocation7 + $0x5c] sm:$0xf]
    %v517 = vld [vmem:[#allocation7 + $0x60] sm:$0xf]
    %v518 = vld [vmem:[#allocation7 + $0x64] sm:$0xf]
    %v519 = vld [vmem:[#allocation7 + $0x68] sm:$0xf]
    %v520 = vld [vmem:[#allocation7 + $0x6c] sm:$0xf]
    %v521 = vld [vmem:[#allocation7 + $0x70] sm:$0xf]
    %v522 = vld [vmem:[#allocation7 + $0x74] sm:$0xf]
    %v523 = vld [vmem:[#allocation7 + $0x78] sm:$0xf]
    %v524 = vld [vmem:[#allocation7 + $0x7c] sm:$0xf]
    %v525 = vld [vmem:[#allocation7 + $0x80] sm:$0xf]
    %v526 = vld [vmem:[#allocation7 + $0x84] sm:$0xf]
    %v527 = vld [vmem:[#allocation7 + $0x88] sm:$0xf]
    %v528 = vld [vmem:[#allocation7 + $0x8c] sm:$0xf]
    %v529 = vld [vmem:[#allocation7 + $0x90] sm:$0xf]
    %v530 = vld [vmem:[#allocation7 + $0x94] sm:$0xf]
    %v531 = vld [vmem:[#allocation7 + $0x98] sm:$0xf]
    %v532 = vld [vmem:[#allocation7 + $0x9c] sm:$0xf]
    %v533 = vld [vmem:[#allocation7 + $0xa0] sm:$0xf]
    %v534 = vld [vmem:[#allocation7 + $0xa4] sm:$0xf]
    %v535 = vld [vmem:[#allocation7 + $0xa8] sm:$0xf]
    %v536 = vld [vmem:[#allocation7 + $0xac] sm:$0xf]
    %v537 = vld [vmem:[#allocation7 + $0xb0] sm:$0xf]
    %v538 = vld [vmem:[#allocation7 + $0xb4] sm:$0xf]
    %v539 = vld [vmem:[#allocation7 + $0xb8] sm:$0xf]
    %v540 = vld [vmem:[#allocation7 + $0xbc] sm:$0xf]
    %v541 = vld [vmem:[%s4] sm:$0x1]
    %v543 = vlaneseq
    %v544 = vshrl.u32 %v543, 7
    %v545 = vsub.s32 0, %v544
    %v546 = vrot.slane %v541, %v545
    %v596 = vunpack.c.l.b16 %v493
    %v597 = vunpack.c.l.b16 %v494
    %v598 = vunpack.c.l.b16 %v495
    %v599 = vunpack.c.l.b16 %v496
    %v600 = vunpack.c.l.b16 %v497
    %v601 = vunpack.c.l.b16 %v498
    %v602 = vunpack.c.l.b16 %v499
    %v603 = vunpack.c.l.b16 %v500
    %v604 = vunpack.c.l.b16 %v501
    %v605 = vunpack.c.l.b16 %v502
    %v606 = vunpack.c.l.b16 %v503
    %v607 = vunpack.c.l.b16 %v504
    %v608 = vunpack.c.l.b16 %v505
    %v609 = vunpack.c.l.b16 %v506
    %v610 = vunpack.c.l.b16 %v507
    %v611 = vunpack.c.l.b16 %v508
    %v612 = vunpack.c.l.b16 %v509
    %v613 = vunpack.c.l.b16 %v510
    %v614 = vunpack.c.l.b16 %v511
    %v615 = vunpack.c.l.b16 %v512
    %v616 = vunpack.c.l.b16 %v513
    %v617 = vunpack.c.l.b16 %v514
    %v618 = vunpack.c.l.b16 %v515
    %v619 = vunpack.c.l.b16 %v516
    %v620 = vunpack.c.l.b16 %v517
    %v621 = vunpack.c.l.b16 %v518
    %v622 = vunpack.c.l.b16 %v519
    %v623 = vunpack.c.l.b16 %v520
    %v624 = vunpack.c.l.b16 %v521
    %v625 = vunpack.c.l.b16 %v522
    %v626 = vunpack.c.l.b16 %v523
    %v627 = vunpack.c.l.b16 %v524
    %v628 = vunpack.c.l.b16 %v525
    %v629 = vunpack.c.l.b16 %v526
    %v630 = vunpack.c.l.b16 %v527
    %v631 = vunpack.c.l.b16 %v528
    %v632 = vunpack.c.l.b16 %v529
    %v633 = vunpack.c.l.b16 %v530
    %v634 = vunpack.c.l.b16 %v531
    %v635 = vunpack.c.l.b16 %v532
    %v636 = vunpack.c.l.b16 %v533
    %v637 = vunpack.c.l.b16 %v534
    %v638 = vunpack.c.l.b16 %v535
    %v639 = vunpack.c.l.b16 %v536
    %v640 = vunpack.c.l.b16 %v537
    %v641 = vunpack.c.l.b16 %v538
    %v642 = vunpack.c.l.b16 %v539
    %v643 = vunpack.c.l.b16 %v540
    %v644 = vpack.c.b16 %v597, %v596
    %v645 = vpack.c.b16 %v599, %v598
    %v646 = vpack.c.b16 %v601, %v600
    %v647 = vpack.c.b16 %v603, %v602
    %v648 = vpack.c.b16 %v605, %v604
    %v649 = vpack.c.b16 %v607, %v606
    %v650 = vpack.c.b16 %v609, %v608
    %v651 = vpack.c.b16 %v611, %v610
    %v652 = vpack.c.b16 %v613, %v612
    %v653 = vpack.c.b16 %v615, %v614
    %v654 = vpack.c.b16 %v617, %v616
    %v655 = vpack.c.b16 %v619, %v618
    %v656 = vpack.c.b16 %v621, %v620
    %v657 = vpack.c.b16 %v623, %v622
    %v658 = vpack.c.b16 %v625, %v624
    %v659 = vpack.c.b16 %v627, %v626
    %v660 = vpack.c.b16 %v629, %v628
    %v661 = vpack.c.b16 %v631, %v630
    %v662 = vpack.c.b16 %v633, %v632
    %v663 = vpack.c.b16 %v635, %v634
    %v664 = vpack.c.b16 %v637, %v636
    %v665 = vpack.c.b16 %v639, %v638
    %v666 = vpack.c.b16 %v641, %v640
    %v667 = vpack.c.b16 %v643, %v642
    %692 = vmatprep.subr.bf16.mxu0 0
    %693 = vmatpush1.bf16.msra.mxu0 %v644
    %694 = vmatprep.subr.bf16.mxu0 0
    %695 = vmatpush1.bf16.msra.mxu0 %v645
    %696 = vmatprep.subr.bf16.mxu0 0
    %697 = vmatpush1.bf16.msra.mxu0 %v646
    %698 = vmatprep.subr.bf16.mxu0 0
    %699 = vmatpush1.bf16.msra.mxu0 %v647
    %700 = vmatprep.subr.bf16.mxu0 0
    %701 = vmatpush1.bf16.msra.mxu0 %v648
    %702 = vmatprep.subr.bf16.mxu0 0
    %703 = vmatpush1.bf16.msra.mxu0 %v649
    %704 = vmatprep.subr.bf16.mxu0 0
    %705 = vmatpush1.bf16.msra.mxu0 %v650
    %706 = vmatprep.subr.bf16.mxu0 0
    %707 = vmatpush1.bf16.msra.mxu0 %v651
    %708 = vmatprep.subr.bf16.mxu0 0
    %709 = vmatpush1.bf16.msra.mxu0 %v652
    %710 = vmatprep.subr.bf16.mxu0 0
    %711 = vmatpush1.bf16.msra.mxu0 %v653
    %712 = vmatprep.subr.bf16.mxu0 0
    %713 = vmatpush1.bf16.msra.mxu0 %v654
    %714 = vmatprep.subr.bf16.mxu0 0
    %715 = vmatpush1.bf16.msra.mxu0 %v655
    %716 = vmatprep.subr.bf16.mxu0 0
    %717 = vmatpush1.bf16.msra.mxu0 %v656
    %718 = vmatprep.subr.bf16.mxu0 0
    %719 = vmatpush1.bf16.msra.mxu0 %v657
    %720 = vmatprep.subr.bf16.mxu0 0
    %721 = vmatpush1.bf16.msra.mxu0 %v658
    %722 = vmatprep.subr.bf16.mxu0 0
    %723 = vmatpush1.bf16.msra.mxu0 %v659
    %724 = vmatprep.mubr.bf16.mxu0 %v491
    %725 = vmatmul.mubr.bf16.gmra.mrb[0].mxu0 %v490
    %v726 = vpop.f32.mrb[0].mxu0
    %v727 = vadd.f32 %v546, %v726
    %v728 = vpop.f32.mrb[0].mxu0
    %v729 = vpop.f32.mrb[0].mxu0
    %v730 = vpop.f32.mrb[0].mxu0
    %731 = vdwg.mxu0
    %732 = vmatprep.subr.bf16.mxu0 0
    %733 = vmatpush1.bf16.msra.mxu0 %v660
    %734 = vmatprep.subr.bf16.mxu0 0
    %735 = vmatpush1.bf16.msra.mxu0 %v661
    %736 = vmatprep.subr.bf16.mxu0 0
    %737 = vmatpush1.bf16.msra.mxu0 %v662
    %738 = vmatprep.subr.bf16.mxu0 0
    %739 = vmatpush1.bf16.msra.mxu0 %v663
    %740 = vmatprep.subr.bf16.mxu0 0
    %741 = vmatpush1.bf16.msra.mxu0 %v664
    %742 = vmatprep.subr.bf16.mxu0 0
    %743 = vmatpush1.bf16.msra.mxu0 %v665
    %744 = vmatprep.subr.bf16.mxu0 0
    %745 = vmatpush1.bf16.msra.mxu0 %v666
    %746 = vmatprep.subr.bf16.mxu0 0
    %747 = vmatpush1.bf16.msra.mxu0 %v667
    %748 = vmatprep.subr.bf16.mxu0 0
    %749 = vmatpush1.bf16.msra.mxu0 0
    %750 = vmatprep.subr.bf16.mxu0 0
    %751 = vmatpush1.bf16.msra.mxu0 0
    %752 = vmatprep.subr.bf16.mxu0 0
    %753 = vmatpush1.bf16.msra.mxu0 0
    %754 = vmatprep.subr.bf16.mxu0 0
    %755 = vmatpush1.bf16.msra.mxu0 0
    %756 = vmatprep.subr.bf16.mxu0 0
    %757 = vmatpush1.bf16.msra.mxu0 0
    %758 = vmatprep.subr.bf16.mxu0 0
    %759 = vmatpush1.bf16.msra.mxu0 0
    %760 = vmatprep.subr.bf16.mxu0 0
    %761 = vmatpush1.bf16.msra.mxu0 0
    %762 = vmatprep.subr.bf16.mxu0 0
    %763 = vmatpush1.bf16.msra.mxu0 0
    %764 = vmatprep.mubr.bf16.mxu0 0
    %765 = vmatmul.mubr.bf16.gmra.mrb[0].mxu0 %v492
    %v766 = vpop.f32.mrb[0].mxu0
    %v767 = vadd.f32 %v727, %v766
    %v768 = vpop.f32.mrb[0].mxu0
    %v769 = vpop.f32.mrb[0].mxu0
    %v770 = vpop.f32.mrb[0].mxu0
    %771 = vdwg.mxu0
    %772 = vst [vmem:[#allocation8] sm:$0xff] %v767
    // Predicated region
    $region34: #{tpu_custom_call.1} parent=1 // pred_check
      _
    $region35: #{tpu_custom_call.1} parent=1 // pred_check_branch
      %774 = sbr.rel (0) target = $region37
    $region36: #{tpu_custom_call.1} parent=1 // pred_region
      %s776 = ssub.s32 128, 128
      %777 = vsyncadd [#allocation4], %s776
      %s779 = sshll.u32 [#allocation8], 4
      %s780 = int_to_ptr.vmem [resolvable:$true] %s779
      %782 = dma.vmem_to_hbm [thread:$0]  %s780, 128, %s5, [#allocation4]
    $region37: #{tpu_custom_call.1} parent=1 // pred_fallthru
      _
    // Predicated region
    $region38: #{tpu_custom_call.1} parent=1 // pred_check
      _
    $region39: #{tpu_custom_call.1} parent=1 // pred_check_branch
      %784 = sbr.rel (0) target = $region41
    $region40: #{tpu_custom_call.1} parent=1 // pred_region
      %785 = dma.done [#allocation4], 128
    $region41: #{tpu_custom_call.1} parent=1 // pred_fallthru
      _
    %786 = vsyncpa [#allocation3], 1
    %787 = vsyncpa [#allocation6], 1
    %788 = vsyncpa [#allocation4], 1

</llo_original>
